<compile_context>
chip_gen: v6e
topology: v6e:2x2x1
jax: 0.10.0
libtpu: 0.0.40
codegen_flags: <defaults>
</compile_context>

<pallas_src>
import jax
import jax.numpy as jnp
from jax.experimental import pallas as pl
from jax.experimental.pallas import tpu as pltpu

_C = 3  # the PyTorch module hardcodes .view(3, 1, 1)

# Tiling knobs.
_MAX_ROW_TILE = 240              # multiple of 8 (sublane) and of 3 (channel cycle)
_TARGET_TILE_ELEMS = 256 * 1024  # ~1 MiB of f32 per tile


def _normalize_kernel(x_ref, mu_ref, inv_std_ref, o_ref):
    # x_ref / o_ref:          (TR, TC) tile of the (N*C, H*W) slab.
    # mu_ref / inv_std_ref:   (TR, 1) per-row stats; TR % 3 == 0 so the same
    #                         channel-cyclic column is valid for every row block.
    x = x_ref[...].astype(jnp.float32)
    o_ref[...] = ((x - mu_ref[...]) * inv_std_ref[...]).astype(o_ref.dtype)


def _pick_tiles(rows, cols):
    # Row tile: full extent if small (legal full-dim block, rows = 3N is a
    # multiple of 3), else a fixed multiple of lcm(8, 3) = 24.
    tr = rows if rows <= _MAX_ROW_TILE else _MAX_ROW_TILE
    # Col tile: lane-dense (>= 512 lanes, multiple of 128), sized so the x tile
    # is ~1 MiB; full extent if cols already fits the budget.
    tc_budget = max(512, _TARGET_TILE_ELEMS // tr)
    tc_budget = (tc_budget // 128) * 128
    tc = cols if cols <= tc_budget else tc_budget
    return tr, tc


def normalize(x, mean, std):
    """x: (N, 3, H, W). mean/std: length-3 sequences. Returns (x - mean) / std."""
    N, C, H, W = x.shape
    assert C == _C, f"Normalize expects {_C} channels, got {C}"
    rows, cols = N * C, H * W

    tr, tc = _pick_tiles(rows, cols)
    grid = (pl.cdiv(rows, tr), pl.cdiv(cols, tc))

    # Per-row (channel-cyclic) stats for one row tile. tr % 3 == 0 always
    # (either tr == rows == 3N or tr == _MAX_ROW_TILE), so the pattern is the
    # same for every row block and the block index below can stay constant.
    mean3 = jnp.asarray(mean, dtype=jnp.float32).reshape(_C, 1)
    inv3 = 1.0 / jnp.asarray(std, dtype=jnp.float32).reshape(_C, 1)
    mu_col = jnp.tile(mean3, (tr // _C, 1))    # (tr, 1)
    inv_col = jnp.tile(inv3, (tr // _C, 1))    # (tr, 1)

    x2d = x.reshape(rows, cols)

    # Explicit VMEM budget: in + out tiles double-buffered, plus the two
    # resident (lane-padded) stat columns, plus headroom.
    itemsize = jnp.dtype(x.dtype).itemsize
    tile_bytes = tr * tc * itemsize
    stat_bytes = tr * 128 * 4
    vmem_limit = min(max(4 * tile_bytes + 4 * stat_bytes + (2 << 20),
                         16 * 1024 * 1024),
                     32 * 1024 * 1024)

    out2d = pl.pallas_call(
        _normalize_kernel,
        out_shape=jax.ShapeDtypeStruct((rows, cols), x.dtype),
        grid_spec=pltpu.PrefetchScalarGridSpec(
            num_scalar_prefetch=0,
            grid=grid,
            in_specs=[
                pl.BlockSpec((tr, tc), lambda i, j: (i, j)),
                pl.BlockSpec((tr, 1), lambda i, j: (0, 0)),
                pl.BlockSpec((tr, 1), lambda i, j: (0, 0)),
            ],
            out_specs=pl.BlockSpec((tr, tc), lambda i, j: (i, j)),
        ),
        compiler_params=pltpu.CompilerParams(
            dimension_semantics=("parallel", "parallel"),
            vmem_limit_bytes=int(vmem_limit),
        ),
    )(x2d, mu_col, inv_col)

    return out2d.reshape(N, C, H, W)


if __name__ == "__main__":
    key = jax.random.PRNGKey(0)
    N, C, H, W = 2, 3, 16, 16
    x = jax.random.uniform(key, (N, C, H, W), dtype=jnp.float32)

    # Deterministic "ImageNet-style" normalization constants.
    mean = [0.485, 0.456, 0.406]
    std = [0.229, 0.224, 0.225]

    out = jax.block_until_ready(normalize(x, mean, std))

    # Reference check against plain JAX broadcasting semantics.
    mu = jnp.asarray(mean, jnp.float32).reshape(1, 3, 1, 1)
    sd = jnp.asarray(std, jnp.float32).reshape(1, 3, 1, 1)
    ref = (x - mu) / sd
    assert out.shape == (N, C, H, W)
    assert jnp.allclose(out, ref, atol=1e-6, rtol=1e-6)

    print("KERNEL_OK")
</pallas_src>

<mosaic_0001>
module attributes {stable_mosaic.version = 11 : i64} {
  func.func @_normalize_kernel(%arg0: i32, %arg1: i32, %arg2: memref<6x256xf32, #tpu.memory_space<vmem>>, %arg3: memref<6x1xf32, #tpu.memory_space<vmem>>, %arg4: memref<6x1xf32, #tpu.memory_space<vmem>>, %arg5: memref<6x256xf32, #tpu.memory_space<vmem>>) attributes {dimension_semantics = [#tpu.dimension_semantics<parallel>, #tpu.dimension_semantics<parallel>], iteration_bounds = array<i64: 1, 1>, scalar_prefetch = 0 : i64, scratch_operands = 0 : i64, tpu.core_type = #tpu.core_type<tc>, window_params = [{transform_indices = @transform_0, window_bounds = array<i64: 6, 256>}, {pipeline_mode = #tpu.pipeline_mode<synchronous>, transform_indices = @transform_1, window_bounds = array<i64: 6, 1>}, {pipeline_mode = #tpu.pipeline_mode<synchronous>, transform_indices = @transform_2, window_bounds = array<i64: 6, 1>}, {transform_indices = @transform_3, window_bounds = array<i64: 6, 256>}]} {
    %c0 = arith.constant 0 : index
    %c0_0 = arith.constant 0 : index
    %0 = vector.load %arg2[%c0, %c0_0] : memref<6x256xf32, #tpu.memory_space<vmem>>, vector<6x256xf32>
    %c0_1 = arith.constant 0 : index
    %c0_2 = arith.constant 0 : index
    %1 = vector.load %arg3[%c0_1, %c0_2] : memref<6x1xf32, #tpu.memory_space<vmem>>, vector<6x1xf32>
    %2 = vector.broadcast %1 : vector<6x1xf32> to vector<6x256xf32>
    %3 = arith.subf %0, %2 : vector<6x256xf32>
    %c0_3 = arith.constant 0 : index
    %c0_4 = arith.constant 0 : index
    %4 = vector.load %arg4[%c0_3, %c0_4] : memref<6x1xf32, #tpu.memory_space<vmem>>, vector<6x1xf32>
    %5 = vector.broadcast %4 : vector<6x1xf32> to vector<6x256xf32>
    %6 = arith.mulf %3, %5 : vector<6x256xf32>
    %c0_5 = arith.constant 0 : index
    %c0_6 = arith.constant 0 : index
    %7 = vector.load %arg5[%c0_5, %c0_6] : memref<6x256xf32, #tpu.memory_space<vmem>>, vector<6x256xf32>
    tpu.vector_store %arg5[%c0_5, %c0_6], %6 {strides = array<i32>} : memref<6x256xf32, #tpu.memory_space<vmem>>, vector<6x256xf32>,
    return
  }
  func.func @transform_0(%arg0: i32, %arg1: i32) -> (i32, i32) {
    %c0_i32 = arith.constant 0 : i32
    return %arg0, %arg1 : i32, i32
  }
  func.func @transform_1(%arg0: i32, %arg1: i32) -> (i32, i32) {
    %c0_i32 = arith.constant 0 : i32
    %c0_i32_0 = arith.constant 0 : i32
    %c0_i32_1 = arith.constant 0 : i32
    return %c0_i32, %c0_i32_0 : i32, i32
  }
  func.func @transform_2(%arg0: i32, %arg1: i32) -> (i32, i32) {
    %c0_i32 = arith.constant 0 : i32
    %c0_i32_0 = arith.constant 0 : i32
    %c0_i32_1 = arith.constant 0 : i32
    return %c0_i32, %c0_i32_0 : i32, i32
  }
  func.func @transform_3(%arg0: i32, %arg1: i32) -> (i32, i32) {
    %c0_i32 = arith.constant 0 : i32
    return %arg0, %arg1 : i32, i32
  }
}

</mosaic_0001>

<llo_original>
// kernel: tpu_custom_call.1
$region0: #{tpu_custom_call.1}
  #allocation0 [shape = 'u32[]', space=smem, size = 0x4, offset = 0x4, fixed_abs, tag = 'smem constant byte address 0x4 - core index']
  #allocation1 [shape = 'u32[144,128]{1,0:T(1,128)}', space=vmem, size = 0x12000, scoped, tag = 'internal scratch']
  %s0 = inlined_call_operand.vmem [shape: f32[6,256], index: 0, kind: input, shape index: {}]
  %s1 = inlined_call_operand.vmem [shape: f32[6,1], index: 1, kind: input, shape index: {}]
  %s2 = inlined_call_operand.vmem [shape: f32[6,1], index: 2, kind: input, shape index: {}]
  %s3 = inlined_call_operand.hbm [shape: f32[6,256], index: 3, kind: output, shape index: {}]
  %s4 = sld [smem:[#allocation0]]
  $region22: #{tpu_custom_call.1} parent=0
    _
  %s6 = ssub.s32 1, %s4
  %s7 = scalar_select 0, %s6, %s4
  $region1: #{tpu_custom_call.1} parent=0
    #allocation2 [shape = 'u8[8192]{0}', space=vmem, size = 0x2000, scoped, tag = 'output window, operand 0, single buffered']
    #allocation3 [shape = 's32[1]{0}', space=sflag, size = 0x4, scoped, tag = 'scoped memory for tpu_custom_call.1']
    %8 = vsyncpa [#allocation3], 0
    // Predicated region
    $region2: #{tpu_custom_call.1} parent=1 // pred_check
      _
    $region3: #{tpu_custom_call.1} parent=1 // pred_check_branch
      %10 = sbr.rel (0) target = $region5
    $region4: #{tpu_custom_call.1} parent=1 // pred_region
      _
    $region5: #{tpu_custom_call.1} parent=1 // pred_fallthru
      _
    // Predicated region
    $region6: #{tpu_custom_call.1} parent=1 // pred_check
      _
    $region7: #{tpu_custom_call.1} parent=1 // pred_check_branch
      %12 = sbr.rel (0) target = $region9
    $region8: #{tpu_custom_call.1} parent=1 // pred_region
      _
    $region9: #{tpu_custom_call.1} parent=1 // pred_fallthru
      _
    // Predicated region
    $region10: #{tpu_custom_call.1} parent=1 // pred_check
      _
    $region11: #{tpu_custom_call.1} parent=1 // pred_check_branch
      %14 = sbr.rel (0) target = $region13
    $region12: #{tpu_custom_call.1} parent=1 // pred_region
      _
    $region13: #{tpu_custom_call.1} parent=1 // pred_fallthru
      _
    %v15 = vld [vmem:[%s0] sm:$0x3f]
    %v16 = vld [vmem:[%s0 + $0x8] sm:$0x3f]
    %v17 = vld [vmem:[%s1] sm:$0x3f]
    %19 = vset.pattern.permute.xlu0 0
    %20 = vperm.xlu0 %19, %v17
    %v21 = vpop.permute.xlu0 %20
    %v23 = vsub.f32 %v15, %v21
    %v24 = vsub.f32 %v16, %v21
    %v25 = vld [vmem:[%s2] sm:$0x3f]
    %27 = vset.pattern.permute.xlu0 0
    %28 = vperm.xlu0 %27, %v25
    %v29 = vpop.permute.xlu0 %28
    %v31 = vmul.f32 %v23, %v29
    %v32 = vmul.f32 %v24, %v29
    %33 = vst [vmem:[#allocation2] sm:$0x3f] %v31
    %34 = vst [vmem:[#allocation2 + $0x8] sm:$0x3f] %v32
    // Predicated region
    $region14: #{tpu_custom_call.1} parent=1 // pred_check
      _
    $region15: #{tpu_custom_call.1} parent=1 // pred_check_branch
      %36 = sbr.rel (0) target = $region17
    $region16: #{tpu_custom_call.1} parent=1 // pred_region
      %s38 = ssub.s32 256, 256
      %39 = vsyncadd [#allocation3], %s38
      %s41 = sshll.u32 [#allocation2], 4
      %s42 = int_to_ptr.vmem [resolvable:$true] %s41
      %44 = dma.vmem_to_hbm [thread:$0]  %s42, 256, %s3, [#allocation3]
    $region17: #{tpu_custom_call.1} parent=1 // pred_fallthru
      _
    // Predicated region
    $region18: #{tpu_custom_call.1} parent=1 // pred_check
      _
    $region19: #{tpu_custom_call.1} parent=1 // pred_check_branch
      %46 = sbr.rel (0) target = $region21
    $region20: #{tpu_custom_call.1} parent=1 // pred_region
      %47 = dma.done [#allocation3], 256
    $region21: #{tpu_custom_call.1} parent=1 // pred_fallthru
      _
    %48 = vsyncpa [#allocation3], 1

</llo_original>
